<compile_context>
chip_gen: v6e
topology: v6e:2x2x1
jax: 0.10.0
libtpu: 0.0.40
codegen_flags: <defaults>
</compile_context>

<pallas_src>
import math
from functools import partial

import jax
import jax.numpy as jnp
from jax import lax
from jax.experimental import pallas as pl
from jax.experimental.pallas import tpu as pltpu

PI = math.pi


# ----------------------------------------------------------------------------
# Parameter / weight materialization (mirrors Conv2dDFT._materialize_weights)
# ----------------------------------------------------------------------------
def materialize_dft_weights(out_channels: int, in_channels: int, k: int) -> jnp.ndarray:
    """DFT weight basis with default (arange) fcc / fch parameters.

    Always computed in float32 (torch default dtype). Returns (O, Cin, K, K, 2).
    """
    dtype = jnp.float32
    O, C, K = out_channels, in_channels, k
    fcc = jnp.arange(O, dtype=dtype).reshape(-1, 1, 1)      # parameter 'fcc' init
    fch = jnp.arange(K, dtype=dtype).reshape(-1, 1, 1)      # parameter 'fch' init
    tc = jnp.arange(C, dtype=dtype).reshape(1, -1, 1)
    tl = jnp.arange(K, dtype=dtype).reshape(1, -1, 1)

    norm_c = lax.rsqrt(jnp.full((O, C, 1), float(C), dtype=dtype))
    kc = norm_c * jnp.concatenate(
        [jnp.cos(fcc * tc * 2.0 * PI / O), -jnp.sin(fcc * tc * 2.0 * PI / O)],
        axis=-1)                                             # (O, C, 2)

    norm_l = lax.rsqrt(jnp.full((K, K, 1), float(K), dtype=dtype))
    kl = norm_l * jnp.concatenate(
        [jnp.cos(fch * tl * 2.0 * PI / K), -jnp.sin(fch * tl * 2.0 * PI / K)],
        axis=-1)                                             # (K, K, 2)

    # exact same (row-major) reshapes/broadcast as the torch code
    w = kc.reshape(O, -1, 2, 1, 1) * kl.reshape(1, 1, 2, -1, K)   # (O, C, 2, K, K)
    return jnp.swapaxes(w, 2, 4)                                  # (O, C, K, K, 2)


# ----------------------------------------------------------------------------
# Pallas kernel: one (batch, row-tile) output block per grid step.
#   K*K whole-tile tap slices -> one MXU matmul -> bias -> one lane-dense store.
# ----------------------------------------------------------------------------
def _conv_kernel(x_ref, w_ref, b_ref, o_ref, *, K, TH, OW, C, resident):
    # x_ref (resident): (1, Hp, Wp, C)   full padded NHWC image of one batch elem
    # x_ref (slab):     (1, TH+K-1, Wp, C)  pre-sliced halo slab for this tile
    # w_ref: (K*K*C, O_pad)              flattened HWIO weights (real+imag folded)
    # b_ref: (1, O_pad)                  2*bias, float32
    # o_ref: (1, 1, TH*OW, O_pad)        flattened output row tile
    if resident:
        row0 = pl.multiple_of(pl.program_id(1) * TH, TH)
        slab = x_ref[0, pl.ds(row0, TH + K - 1), :, :]      # (TH+K-1, Wp, C)
    else:
        slab = x_ref[0]                                     # (TH+K-1, Wp, C)

    # Vectorized im2col: K*K whole-tile tap slices, concat along channels.
    # Patch column (kh*K + kw)*C + c matches the w_ref row order.
    taps = [slab[kh:kh + TH, kw:kw + OW, :] for kh in range(K) for kw in range(K)]
    patch = jnp.concatenate(taps, axis=-1).reshape(TH * OW, K * K * C)

    # One MXU matmul per tile; f32 accumulation regardless of input dtype.
    acc = jnp.dot(patch, w_ref[...], preferred_element_type=jnp.float32)
    acc = acc + b_ref[...].astype(jnp.float32)              # (1, O_pad) broadcast

    # Single contiguous, lane-dense store (O_pad is a multiple of 128).
    o_ref[0, 0] = acc.astype(o_ref.dtype)


# ----------------------------------------------------------------------------
# Wrapper helpers
# ----------------------------------------------------------------------------
def _as_pair(v):
    if isinstance(v, (tuple, list)):
        assert len(v) == 2
        return (int(v[0]), int(v[1]))
    return (int(v), int(v))


def _round_up(x, m):
    return ((x + m - 1) // m) * m


def _vmem_tile_bytes(shape, dtype):
    """Conservative VMEM footprint of a block (lane pad to 128, sublane to 8)."""
    lead = 1
    for d in shape[:-2]:
        lead *= int(d)
    sub = _round_up(int(shape[-2]), 8)
    lane = _round_up(int(shape[-1]), 128)
    return lead * sub * lane * jnp.dtype(dtype).itemsize


# ----------------------------------------------------------------------------
# Wrapper (layout conversion, weight combination, padding, tiling choice)
# ----------------------------------------------------------------------------
def conv2d_dft_forward(x_nchw: jnp.ndarray, bias, out_channels: int, kernel_size,
                       stride=1, padding=0, dilation=1, groups: int = 1,
                       row_tile=None, compute_dtype=jnp.bfloat16,
                       x_block_mode="auto", target_rows=512) -> jnp.ndarray:
    """Forward pass of Conv2dDFT (real-input branch) as a Pallas TPU kernel.

    row_tile is a hint (rebalanced / shrunk to fit VMEM). compute_dtype defaults
    to bfloat16 (MXU-native on v5e/v6e/v7x) with float32 accumulation; pass
    jnp.float32 for full precision. x_block_mode: "auto" | "resident" | "slab".
    """
    kh_, kw_ = _as_pair(kernel_size)
    assert kh_ == kw_, "only square kernels are supported"
    assert _as_pair(stride) == (1, 1), "TODO(synk): stride > 1 not implemented"
    assert _as_pair(dilation) == (1, 1), "TODO(synk): dilation > 1 not implemented"
    assert groups == 1, "TODO(synk): groups > 1 not implemented"
    # TODO(synk): complex-input branch (x.shape[-1] == 2) of the torch module.
    assert x_nchw.shape[-1] != 2, "complex-input branch not implemented"
    assert x_block_mode in ("auto", "resident", "slab")

    N, C, H, W = x_nchw.shape
    K = kh_
    O = out_channels
    ph, pw = _as_pair(padding)

    cdt = jnp.dtype(compute_dtype)
    out_dtype = x_nchw.dtype
    itemsize = cdt.itemsize
    out_isz = jnp.dtype(out_dtype).itemsize

    OH = H + 2 * ph - K + 1
    OW = W + 2 * pw - K + 1
    assert OH > 0 and OW > 0
    OW_pad = _round_up(OW, 8)          # M = TH*OW_pad is always a multiple of 8
    O_pad = _round_up(O, 128)          # lane-dense (unmasked) output stores
    Wp_pad = OW_pad + K - 1
    KKC = K * K * C

    # ---- generation-aware VMEM budget (v7x: 64 MiB/TC, v5e/v6e: 128 MiB) ----
    try:
        vmem_cap = int(getattr(pltpu.get_tpu_info(), "vmem_capacity_bytes",
                               64 * 1024 * 1024))
    except Exception:
        vmem_cap = 64 * 1024 * 1024
    budget = max(32 * 1024 * 1024,
                 min(vmem_cap - 16 * 1024 * 1024, 100 * 1024 * 1024))

    def cfg(th):
        t = -(-OH // th)               # cdiv
        th2 = -(-OH // t)              # rebalance: minimal padded waste
        return t, th2, t * th2         # (T, TH, OH_pad)

    def vmem_need(mode, th):
        _, th2, oh_pad = cfg(th)
        hp_pad = oh_pad + K - 1
        m = th2 * OW_pad
        if mode == "resident":
            x_blk = _vmem_tile_bytes((hp_pad, Wp_pad, C), cdt)
            slab_tmp = _vmem_tile_bytes((th2 + K - 1, Wp_pad, C), cdt)
        else:
            x_blk = _vmem_tile_bytes((th2 + K - 1, Wp_pad, C), cdt)
            slab_tmp = 0
        w_blk = _vmem_tile_bytes((KKC, O_pad), cdt)
        b_blk = _vmem_tile_bytes((1, O_pad), jnp.float32)
        o_blk = _vmem_tile_bytes((m, O_pad), out_dtype)
        patch = _vmem_tile_bytes((m, KKC), cdt)
        acc = _vmem_tile_bytes((m, O_pad), jnp.float32)
        return (2 * (x_blk + w_blk + b_blk + o_blk)      # double-buffered blocks
                + slab_tmp + patch + acc + (2 << 20))    # temps + margin

    # ---- row-tile & x-blocking-mode selection --------------------------------
    if row_tile is not None:
        TH = max(1, min(int(row_tile), OH))
    else:
        TH = max(1, min(OH, target_rows // OW_pad))      # target M ~= target_rows

    mode = x_block_mode
    if mode == "auto":
        mode = "resident" if vmem_need("resident", TH) <= budget else "slab"
    while vmem_need(mode, TH) > budget and TH > 1:
        TH -= 1
    if vmem_need(mode, TH) > budget:
        raise ValueError(
            f"Conv2dDFT: tile does not fit VMEM budget ({budget} bytes) even at "
            f"row_tile=1 in mode={mode!r}; reduce width/channels or use slab mode.")
    T, TH, OH_pad = cfg(TH)
    Hp_pad = OH_pad + K - 1
    M = TH * OW_pad

    # ---- weights & bias (DFT-materialized, real+imag folded by linearity) ----
    w5 = materialize_dft_weights(O, C, K)                 # (O, C, K, K, 2)
    w_eff = w5[..., 0] + w5[..., 1]                       # (O, C, K, K)
    # flatten to (K*K*C, O) with row order (kh, kw, c) to match the im2col patch
    w_flat = jnp.transpose(w_eff, (2, 3, 1, 0)).reshape(KKC, O)
    w_flat = jnp.pad(w_flat, ((0, 0), (0, O_pad - O))).astype(cdt)

    b_eff = 2.0 * bias if bias is not None else jnp.zeros((O,), jnp.float32)
    b2d = jnp.pad(b_eff.astype(jnp.float32), (0, O_pad - O)).reshape(1, O_pad)

    # ---- input layout: NCHW -> NHWC, zero pad (conv pad + alignment pad) -----
    # TODO(synk): keep the model NHWC end-to-end and fold the zero padding into
    # the kernel (halo index_map) to drop these extra HBM passes.
    x_nhwc = jnp.transpose(x_nchw, (0, 2, 3, 1)).astype(cdt)
    x_nhwc = jnp.pad(
        x_nhwc,
        ((0, 0), (ph, ph + (OH_pad - OH)), (pw, pw + (OW_pad - OW)), (0, 0)))
    # x_nhwc: (N, Hp_pad, Wp_pad, C)

    L = TH + K - 1
    if mode == "resident":
        # Full padded image resident per batch element; block index constant in
        # t, so the image DMA is not re-issued across row tiles of one image.
        x_in = x_nhwc
        x_spec = pl.BlockSpec((1, Hp_pad, Wp_pad, C), lambda n, t: (n, 0, 0, 0))
    else:
        # Slab (halo) blocking of x along H: bounded VMEM footprint per step
        # (needed on v7x's 64 MiB when the full image does not fit).
        x_in = jnp.stack(
            [x_nhwc[:, t * TH:t * TH + L] for t in range(T)], axis=1
        ).reshape(N * T, L, Wp_pad, C)
        x_spec = pl.BlockSpec((1, L, Wp_pad, C), lambda n, t: (n * T + t, 0, 0, 0))

    # Advisory cost estimate for XLA scheduling around the custom call.
    flops = 2 * N * T * M * KKC * O_pad
    bytes_accessed = int(x_in.size * itemsize + w_flat.size * itemsize
                         + b2d.size * 4 + N * T * M * O_pad * out_isz)
    cost = pl.CostEstimate(flops=flops, transcendentals=0,
                           bytes_accessed=bytes_accessed)

    out = pl.pallas_call(
        partial(_conv_kernel, K=K, TH=TH, OW=OW_pad, C=C,
                resident=(mode == "resident")),
        out_shape=jax.ShapeDtypeStruct((N, T, M, O_pad), out_dtype),
        grid_spec=pltpu.PrefetchScalarGridSpec(
            num_scalar_prefetch=0,
            grid=(N, T),
            in_specs=[
                x_spec,
                pl.BlockSpec((KKC, O_pad), lambda n, t: (0, 0)),
                pl.BlockSpec((1, O_pad), lambda n, t: (0, 0)),
            ],
            out_specs=pl.BlockSpec((1, 1, M, O_pad), lambda n, t: (n, t, 0, 0)),
        ),
        compiler_params=pltpu.CompilerParams(
            # Batch axis is split across TensorCores; row tiles stay on one core
            # so the (resident) image block is never duplicated across cores.
            dimension_semantics=("parallel", "arbitrary"),
            vmem_limit_bytes=int(budget)),
        cost_estimate=cost,
    )(x_in, w_flat, b2d)

    # (N, T, TH*OW_pad, O_pad) -> (N, OH_pad, OW_pad, O_pad) -> crop -> NCHW
    out = out.reshape(N, OH_pad, OW_pad, O_pad)[:, :OH, :OW, :O]
    return jnp.transpose(out, (0, 3, 1, 2))


# ----------------------------------------------------------------------------
# Pure-JAX reference (matches the torch forward literally: two convs + bias each)
# ----------------------------------------------------------------------------
def _reference(x, bias, out_channels, kernel_size, padding):
    K = kernel_size
    w5 = materialize_dft_weights(out_channels, x.shape[1], K)
    pad = ((padding, padding), (padding, padding))
    dn = ("NCHW", "OIHW", "NCHW")
    y0 = lax.conv_general_dilated(x, w5[..., 0], (1, 1), pad, dimension_numbers=dn,
                                  precision=lax.Precision.HIGHEST)
    y1 = lax.conv_general_dilated(x, w5[..., 1], (1, 1), pad, dimension_numbers=dn,
                                  precision=lax.Precision.HIGHEST)
    b = bias[None, :, None, None]
    return (y0 + b) + (y1 + b)


# ----------------------------------------------------------------------------
if __name__ == "__main__":
    key = jax.random.PRNGKey(0)
    kx, kb = jax.random.split(key)

    N, Cin, H, W = 2, 4, 16, 16
    Cout, K = 8, 3

    x = jax.random.normal(kx, (N, Cin, H, W), dtype=jnp.float32)
    # torch: torch.normal(mean=0.0, std=0.5, size=(out_channels,))
    bias = 0.5 * jax.random.normal(kb, (Cout,), dtype=jnp.float32)

    # Run 1: f32 compute, VALID conv, explicit ragged row-tile hint, forced
    # slab-blocked x (exercises halo slabs + OH/OW alignment padding + 2-D grid).
    y1 = jax.block_until_ready(conv2d_dft_forward(
        x, bias, Cout, K, padding=0, row_tile=5,
        compute_dtype=jnp.float32, x_block_mode="slab"))
    r1 = _reference(x, bias, Cout, K, 0)
    assert y1.shape == r1.shape == (N, Cout, H - K + 1, W - K + 1), y1.shape
    err1 = float(jnp.max(jnp.abs(y1 - r1)))
    assert jnp.allclose(y1, r1, atol=1e-4, rtol=1e-4), err1

    # Run 2: f32 compute, padded conv, auto tile, resident image block
    # (one 256-row MXU matmul per image).
    y2 = jax.block_until_ready(conv2d_dft_forward(
        x, bias, Cout, K, padding=1, compute_dtype=jnp.float32))
    r2 = _reference(x, bias, Cout, K, 1)
    assert y2.shape == r2.shape == (N, Cout, H, W), y2.shape
    err2 = float(jnp.max(jnp.abs(y2 - r2)))
    assert jnp.allclose(y2, r2, atol=1e-4, rtol=1e-4), err2

    # Run 3: default bf16 MXU inputs (f32 accumulation) — looser tolerance.
    y3 = jax.block_until_ready(conv2d_dft_forward(x, bias, Cout, K, padding=1))
    err3 = float(jnp.max(jnp.abs(y3 - r2)))
    assert jnp.allclose(y3, r2, atol=5e-2, rtol=5e-2), err3

    print("KERNEL_OK")
</pallas_src>

<mosaic_0001>
module attributes {stable_mosaic.version = 11 : i64} {
  func.func @_conv_kernel(%arg0: i32, %arg1: i32, %arg2: memref<1x7x18x4xf32, #tpu.memory_space<vmem>>, %arg3: memref<36x128xf32, #tpu.memory_space<vmem>>, %arg4: memref<1x128xf32, #tpu.memory_space<vmem>>, %arg5: memref<1x1x80x128xf32, #tpu.memory_space<vmem>>) attributes {dimension_semantics = [#tpu.dimension_semantics<parallel>, #tpu.dimension_semantics<arbitrary>], iteration_bounds = array<i64: 2, 3>, scalar_prefetch = 0 : i64, scratch_operands = 0 : i64, tpu.core_type = #tpu.core_type<tc>, window_params = [{transform_indices = @transform_0, window_bounds = array<i64: 1, 7, 18, 4>}, {pipeline_mode = #tpu.pipeline_mode<synchronous>, transform_indices = @transform_1, window_bounds = array<i64: 36, 128>}, {pipeline_mode = #tpu.pipeline_mode<synchronous>, transform_indices = @transform_2, window_bounds = array<i64: 1, 128>}, {transform_indices = @transform_3, window_bounds = array<i64: 1, 1, 80, 128>}]} {
    %c0 = arith.constant 0 : index
    %c0_0 = arith.constant 0 : index
    %c0_1 = arith.constant 0 : index
    %c0_2 = arith.constant 0 : index
    %0 = vector.load %arg2[%c0, %c0_0, %c0_1, %c0_2] : memref<1x7x18x4xf32, #tpu.memory_space<vmem>>, vector<1x7x18x4xf32>
    %1 = vector.shape_cast %0 : vector<1x7x18x4xf32> to vector<7x18x4xf32>
    %2 = vector.extract_strided_slice %1 {offsets = [0, 0, 0], sizes = [5, 16, 4], strides = [1, 1, 1]} : vector<7x18x4xf32> to vector<5x16x4xf32>
    %3 = vector.extract_strided_slice %1 {offsets = [0, 1, 0], sizes = [5, 16, 4], strides = [1, 1, 1]} : vector<7x18x4xf32> to vector<5x16x4xf32>
    %4 = vector.extract_strided_slice %1 {offsets = [0, 2, 0], sizes = [5, 16, 4], strides = [1, 1, 1]} : vector<7x18x4xf32> to vector<5x16x4xf32>
    %5 = vector.extract_strided_slice %1 {offsets = [1, 0, 0], sizes = [5, 16, 4], strides = [1, 1, 1]} : vector<7x18x4xf32> to vector<5x16x4xf32>
    %6 = vector.extract_strided_slice %1 {offsets = [1, 1, 0], sizes = [5, 16, 4], strides = [1, 1, 1]} : vector<7x18x4xf32> to vector<5x16x4xf32>
    %7 = vector.extract_strided_slice %1 {offsets = [1, 2, 0], sizes = [5, 16, 4], strides = [1, 1, 1]} : vector<7x18x4xf32> to vector<5x16x4xf32>
    %8 = vector.extract_strided_slice %1 {offsets = [2, 0, 0], sizes = [5, 16, 4], strides = [1, 1, 1]} : vector<7x18x4xf32> to vector<5x16x4xf32>
    %9 = vector.extract_strided_slice %1 {offsets = [2, 1, 0], sizes = [5, 16, 4], strides = [1, 1, 1]} : vector<7x18x4xf32> to vector<5x16x4xf32>
    %10 = vector.extract_strided_slice %1 {offsets = [2, 2, 0], sizes = [5, 16, 4], strides = [1, 1, 1]} : vector<7x18x4xf32> to vector<5x16x4xf32>
    %11 = tpu.concatenate %2, %3, %4, %5, %6, %7, %8, %9, %10 in 2 : vector<5x16x4xf32>, vector<5x16x4xf32>, vector<5x16x4xf32>, vector<5x16x4xf32>, vector<5x16x4xf32>, vector<5x16x4xf32>, vector<5x16x4xf32>, vector<5x16x4xf32>, vector<5x16x4xf32> -> vector<5x16x36xf32>
    %12 = vector.shape_cast %11 : vector<5x16x36xf32> to vector<80x36xf32>
    %c0_3 = arith.constant 0 : index
    %c0_4 = arith.constant 0 : index
    %13 = vector.load %arg3[%c0_3, %c0_4] : memref<36x128xf32, #tpu.memory_space<vmem>>, vector<36x128xf32>
    %cst = arith.constant dense<0.000000e+00> : vector<80x128xf32>
    %14 = tpu.matmul %12, %13, %cst {dimension_numbers = #tpu.dot_dimension_numbers<[1], [0], [0], [1], [0, 0, 1, 1], [], []>} : vector<80x36xf32>, vector<36x128xf32>, vector<80x128xf32> -> vector<80x128xf32>
    %c0_5 = arith.constant 0 : index
    %c0_6 = arith.constant 0 : index
    %15 = vector.load %arg4[%c0_5, %c0_6] : memref<1x128xf32, #tpu.memory_space<vmem>>, vector<1x128xf32>
    %16 = vector.broadcast %15 : vector<1x128xf32> to vector<80x128xf32>
    %17 = arith.addf %14, %16 : vector<80x128xf32>
    %c0_7 = arith.constant 0 : index
    %c0_8 = arith.constant 0 : index
    %c0_9 = arith.constant 0 : index
    %c0_10 = arith.constant 0 : index
    %18 = vector.load %arg5[%c0_7, %c0_8, %c0_9, %c0_10] : memref<1x1x80x128xf32, #tpu.memory_space<vmem>>, vector<1x1x80x128xf32>
    %19 = vector.shape_cast %18 : vector<1x1x80x128xf32> to vector<80x128xf32>
    %20 = vector.shape_cast %17 : vector<80x128xf32> to vector<1x1x80x128xf32>
    tpu.vector_store %arg5[%c0_7, %c0_8, %c0_9, %c0_10], %20 {strides = array<i32>} : memref<1x1x80x128xf32, #tpu.memory_space<vmem>>, vector<1x1x80x128xf32>,
    return
  }
  func.func @transform_0(%arg0: i32, %arg1: i32) -> (i32, i32, i32, i32) {
    %c3_i32 = arith.constant 3 : i32
    %0 = arith.muli %arg0, %c3_i32 : i32
    %1 = arith.addi %0, %arg1 : i32
    %c0_i32 = arith.constant 0 : i32
    %c0_i32_0 = arith.constant 0 : i32
    %c0_i32_1 = arith.constant 0 : i32
    %c0_i32_2 = arith.constant 0 : i32
    return %1, %c0_i32, %c0_i32_0, %c0_i32_1 : i32, i32, i32, i32
  }
  func.func @transform_1(%arg0: i32, %arg1: i32) -> (i32, i32) {
    %c0_i32 = arith.constant 0 : i32
    %c0_i32_0 = arith.constant 0 : i32
    %c0_i32_1 = arith.constant 0 : i32
    return %c0_i32, %c0_i32_0 : i32, i32
  }
  func.func @transform_2(%arg0: i32, %arg1: i32) -> (i32, i32) {
    %c0_i32 = arith.constant 0 : i32
    %c0_i32_0 = arith.constant 0 : i32
    %c0_i32_1 = arith.constant 0 : i32
    return %c0_i32, %c0_i32_0 : i32, i32
  }
  func.func @transform_3(%arg0: i32, %arg1: i32) -> (i32, i32, i32, i32) {
    %c0_i32 = arith.constant 0 : i32
    %c0_i32_0 = arith.constant 0 : i32
    %c0_i32_1 = arith.constant 0 : i32
    return %arg0, %arg1, %c0_i32, %c0_i32_0 : i32, i32, i32, i32
  }
}

</mosaic_0001>

<llo_original>
// kernel: tpu_custom_call.1
$region0: #{tpu_custom_call.1}
  #allocation0 [shape = 'u32[]', space=smem, size = 0x4, offset = 0x4, fixed_abs, tag = 'smem constant byte address 0x4 - core index']
  #allocation1 [shape = 'u32[144,128]{1,0:T(1,128)}', space=vmem, size = 0x12000, scoped, tag = 'internal scratch']
  %s0 = inlined_call_operand.vmem [shape: f32[6,7,18,4], index: 0, kind: input, shape index: {}]
  %s1 = inlined_call_operand.vmem [shape: f32[36,128], index: 1, kind: input, shape index: {}]
  %s2 = inlined_call_operand.vmem [shape: f32[1,128], index: 2, kind: input, shape index: {}]
  %s3 = inlined_call_operand.hbm [shape: f32[2,3,80,128], index: 3, kind: output, shape index: {}]
  %s4 = sld [smem:[#allocation0]]
  $region45: #{tpu_custom_call.1} parent=0
    _
  %s6 = ssub.s32 1, %s4
  %s7 = scalar_select 0, %s6, %s4
  $region1: #{tpu_custom_call.1} parent=0
    #allocation2 [shape = 'u8[81920]{0}', space=vmem, size = 0x14000, scoped, tag = 'output window, operand 0']
    #allocation3 [shape = 's32[2]{0}', space=sflag, size = 0x8, scoped, tag = 'scoped memory for tpu_custom_call.1']
    %8 = vsyncpa [#allocation3], 0
    %s9 = scalar_lea.sflag [#allocation3], 1
    %10 = vsyncpa %s9, 0
    loop: start=0, step=1, limit=8
    $region2: #{tpu_custom_call.1} parent=1 // loop_pre_header
      _
    $region3: #{tpu_custom_call.1} parent=1 // loop_header
      %s12 = sphi 0, %s16
      %p13 = scmp.ge.s32.totalorder %s12, 8
      %s19 = sphi 0, %s31
      %s20 = sphi 0, %s27
      %s21 = sphi 0, %s19
      %s22 = sphi 0, %s20
      %s23 = sphi 0, %s21
      %s24 = sphi 0, %s22
      %s38 = sphi 0, %s40
      %s41 = sphi 0, %s38
      %s42 = sphi 0, %s41
      %s58 = sphi 0, %s42
      %s62 = sphi 0, %s62
      %s64 = sphi 0, %s62
      %s65 = sphi 0, %s64
      %s79 = sphi 0, %s65
      %s83 = sphi 0, %s83
      %s85 = sphi 0, %s83
      %s86 = sphi 0, %s85
      %s100 = sphi 0, %s86
      %s108 = sphi 0, %s110
      %s111 = sphi 0, %s108
      %s112 = sphi 0, %s111
      %s128 = sphi 0, %s112
    $region4: #{tpu_custom_call.1} parent=1 // loop_header_branch
      %15 = sbr.rel (%p13) target = $region8
    $region5: #{tpu_custom_call.1} parent=1 // loop_body
      %s17 = ssub.s32 %s12, 1
      %s18 = ssub.s32 %s12, 2
      %s25 = sadd.s32 1, %s20
      %p26 = scmp.ge.s32.totalorder %s25, 3
      %s27 = scalar_select %p26, 0, %s25
      %s28 = sadd.s32 1, %s19
      %s29 = scalar_select %p26, %s28, %s19
      %p30 = scmp.ge.s32.totalorder %s29, 2
      %s31 = scalar_select %p30, 0, %s29
      %s32 = smul.u32 %s19, 3
      %s33 = sadd.s32 %s32, %s20
      %s34 = smul.u32 %s31, 3
      %s35 = sadd.s32 %s34, %s27
      %s36 = ssub.s32 %s33, %s35
      %p37 = scmp.eq.s32.totalorder %s36, 0
      %s39 = sadd.s32 %s38, 1
      %s40 = scalar_select %p37, %s38, %s39
      %p43 = pneg %p37
      %p44 = scmp.eq.s32.totalorder %s12, 5
      %p45 = por %p43, %p44
      %p46 = scmp.ne.s32.totalorder %s38, %s41
      %p47 = scmp.eq.s32.totalorder %s12, 0
      %p48 = por %p46, %p47
      %p49 = scmp.ne.s32.totalorder %s38, %s41
      %p50 = scmp.eq.s32.totalorder %s17, 5
      %p51 = por %p49, %p50
      %p52 = scmp.ne.s32.totalorder %s41, %s42
      %p53 = scmp.eq.s32.totalorder %s17, 0
      %p54 = por %p52, %p53
      %p55 = scmp.ne.s32.totalorder %s41, %s42
      %p56 = scmp.eq.s32.totalorder %s18, 5
      %p57 = por %p55, %p56
      %p59 = scmp.ne.s32.totalorder %s42, %s58
      %p60 = scmp.eq.s32.totalorder %s18, 0
      %p61 = por %p59, %p60
      %s63 = sadd.s32 %s62, 1
      %p66 = scmp.eq.s32.totalorder %s12, 5
      %p67 = scmp.ne.s32.totalorder %s62, %s64
      %p68 = scmp.eq.s32.totalorder %s12, 0
      %p69 = por %p67, %p68
      %p70 = scmp.ne.s32.totalorder %s62, %s64
      %p71 = scmp.eq.s32.totalorder %s17, 5
      %p72 = por %p70, %p71
      %p73 = scmp.ne.s32.totalorder %s64, %s65
      %p74 = scmp.eq.s32.totalorder %s17, 0
      %p75 = por %p73, %p74
      %p76 = scmp.ne.s32.totalorder %s64, %s65
      %p77 = scmp.eq.s32.totalorder %s18, 5
      %p78 = por %p76, %p77
      %p80 = scmp.ne.s32.totalorder %s65, %s79
      %p81 = scmp.eq.s32.totalorder %s18, 0
      %p82 = por %p80, %p81
      %s84 = sadd.s32 %s83, 1
      %p87 = scmp.eq.s32.totalorder %s12, 5
      %p88 = scmp.ne.s32.totalorder %s83, %s85
      %p89 = scmp.eq.s32.totalorder %s12, 0
      %p90 = por %p88, %p89
      %p91 = scmp.ne.s32.totalorder %s83, %s85
      %p92 = scmp.eq.s32.totalorder %s17, 5
      %p93 = por %p91, %p92
      %p94 = scmp.ne.s32.totalorder %s85, %s86
      %p95 = scmp.eq.s32.totalorder %s17, 0
      %p96 = por %p94, %p95
      %p97 = scmp.ne.s32.totalorder %s85, %s86
      %p98 = scmp.eq.s32.totalorder %s18, 5
      %p99 = por %p97, %p98
      %p101 = scmp.ne.s32.totalorder %s86, %s100
      %p102 = scmp.eq.s32.totalorder %s18, 0
      %p103 = por %p101, %p102
      %s104 = ssub.s32 %s19, %s31
      %s105 = ssub.s32 %s20, %s27
      %s106 = sor.u32 %s104, %s105
      %p107 = scmp.eq.s32.totalorder %s106, 0
      %s109 = sadd.s32 %s108, 1
      %s110 = scalar_select %p107, %s108, %s109
      %p113 = pneg %p107
      %p114 = scmp.eq.s32.totalorder %s12, 5
      %p115 = por %p113, %p114
      %p116 = scmp.ne.s32.totalorder %s108, %s111
      %p117 = scmp.eq.s32.totalorder %s12, 0
      %p118 = por %p116, %p117
      %p119 = scmp.ne.s32.totalorder %s108, %s111
      %p120 = scmp.eq.s32.totalorder %s17, 5
      %p121 = por %p119, %p120
      %p122 = scmp.ne.s32.totalorder %s111, %s112
      %p123 = scmp.eq.s32.totalorder %s17, 0
      %p124 = por %p122, %p123
      %p125 = scmp.ne.s32.totalorder %s111, %s112
      %p126 = scmp.eq.s32.totalorder %s18, 5
      %p127 = por %p125, %p126
      %p129 = scmp.ne.s32.totalorder %s112, %s128
      %p130 = scmp.eq.s32.totalorder %s18, 0
      %p131 = por %p129, %p130
      %p132 = scmp.le.s32.totalorder 1, %s12
      %p133 = scmp.lt.s32.totalorder %s12, 7
      %p134 = pnand %p132, %p133
      %p135 = pneg %p134
      // Predicated region
      $region9: #{tpu_custom_call.1} parent=5 // pred_check
        _
      $region10: #{tpu_custom_call.1} parent=5 // pred_check_branch
        %137 = sbr.rel (%p134) target = $region12
      $region11: #{tpu_custom_call.1} parent=5 // pred_region
        %s138 = ssub.s32 %s12, 1
        // Predicated region
        $region13: #{tpu_custom_call.1} parent=11 // pred_check
          %p139 = pneg %p75
        $region14: #{tpu_custom_call.1} parent=11 // pred_check_branch
          %141 = sbr.rel (%p139) target = $region16
        $region15: #{tpu_custom_call.1} parent=11 // pred_region
          _
        $region16: #{tpu_custom_call.1} parent=11 // pred_fallthru
          _
        // Predicated region
        $region17: #{tpu_custom_call.1} parent=11 // pred_check
          %p142 = pneg %p96
        $region18: #{tpu_custom_call.1} parent=11 // pred_check_branch
          %144 = sbr.rel (%p142) target = $region20
        $region19: #{tpu_custom_call.1} parent=11 // pred_region
          _
        $region20: #{tpu_custom_call.1} parent=11 // pred_fallthru
          _
      $region12: #{tpu_custom_call.1} parent=5 // pred_fallthru
        _
      %p145 = scmp.lt.s32.totalorder %s12, 6
      // Predicated region
      $region21: #{tpu_custom_call.1} parent=5 // pred_check
        %p146 = pneg %p145
      $region22: #{tpu_custom_call.1} parent=5 // pred_check_branch
        %148 = sbr.rel (%p146) target = $region24
      $region23: #{tpu_custom_call.1} parent=5 // pred_region
        // Predicated region
        $region25: #{tpu_custom_call.1} parent=23 // pred_check
          %p149 = pneg %p48
        $region26: #{tpu_custom_call.1} parent=23 // pred_check_branch
          %151 = sbr.rel (%p149) target = $region28
        $region27: #{tpu_custom_call.1} parent=23 // pred_region
          %s152 = smul.u32 %s19, 3
          %s153 = sadd.s32 %s152, %s20
          %p154 = scmp.lt.s32.totalorder %s153, 5
          %s155 = scalar_select %p154, %s153, 5
          %s156 = smul.addr %s155, 21
          %s157 = smul.addr %s156, 8
          %s158 = scalar_lea.vmem %s0, %s157
          %s159 = smul.u32 %s19, 3
          %s160 = sadd.s32 %s159, %s20
        $region28: #{tpu_custom_call.1} parent=23 // pred_fallthru
          _
      $region24: #{tpu_custom_call.1} parent=5 // pred_fallthru
        _
      %p161 = scmp.le.s32.totalorder 1, %s12
      %p162 = scmp.lt.s32.totalorder %s12, 7
      %p163 = pnand %p161, %p162
      %p164 = pneg %p163
      // Predicated region
      $region29: #{tpu_custom_call.1} parent=5 // pred_check
        _
      $region30: #{tpu_custom_call.1} parent=5 // pred_check_branch
        %166 = sbr.rel (%p163) target = $region32
      $region31: #{tpu_custom_call.1} parent=5 // pred_region
        %s167 = ssub.s32 %s12, 1
        %s168 = smul.u32 %s21, 3
        %s169 = sadd.s32 %s168, %s22
        %p170 = scmp.lt.s32.totalorder %s169, 5
        %s171 = scalar_select %p170, %s169, 5
        %s172 = smul.addr %s171, 21
        %s173 = smul.addr %s172, 8
        %s174 = scalar_lea.vmem %s0, %s173
        %p175 = pneg %p54
        %p176 = pneg %p51
        %p177 = pneg %p75
        %p178 = pneg %p72
        %p179 = pneg %p96
        %p180 = pneg %p93
        %p181 = pneg %p124
        %p182 = pneg %p121
        %s183 = sand.u32 %s111, 1
        %s184 = scalar_lea.sflag [#allocation3], %s183
        %s185 = sand.u32 %s111, 1
        %s186 = smul.addr %s185, 80
        %s187 = scalar_lea.vmem [#allocation2], %s186
        %s188 = smul.u32 %s21, 3
        %s189 = sadd.s32 %s188, %s22
        %p190 = scmp.lt.s32.totalorder %s189, 5
        %s191 = scalar_select %p190, %s189, 5
        %s192 = smul.addr %s191, 21
        %s193 = smul.addr %s192, 8
        %s194 = scalar_lea.vmem %s0, %s193
        %s195 = smul.u32 %s21, 3
        %s196 = sadd.s32 %s195, %s22
        %v197 = vld [vmem:[%s194] sm:$0xff]
        %v198 = vld [vmem:[%s194 + $0x8] sm:$0xff]
        %v199 = vld [vmem:[%s194 + $0x10] sm:$0x3]
        %v200 = vld [vmem:[%s194 + $0x18] sm:$0xff]
        %v201 = vld [vmem:[%s194 + $0x20] sm:$0xff]
        %v202 = vld [vmem:[%s194 + $0x28] sm:$0x3]
        %v203 = vld [vmem:[%s194 + $0x30] sm:$0xff]
        %v204 = vld [vmem:[%s194 + $0x38] sm:$0xff]
        %v205 = vld [vmem:[%s194 + $0x40] sm:$0x3]
        %v206 = vld [vmem:[%s194 + $0x48] sm:$0xff]
        %v207 = vld [vmem:[%s194 + $0x50] sm:$0xff]
        %v208 = vld [vmem:[%s194 + $0x58] sm:$0x3]
        %v209 = vld [vmem:[%s194 + $0x60] sm:$0xff]
        %v210 = vld [vmem:[%s194 + $0x68] sm:$0xff]
        %v211 = vld [vmem:[%s194 + $0x70] sm:$0x3]
        %v212 = vld [vmem:[%s194 + $0x78] sm:$0xff]
        %v213 = vld [vmem:[%s194 + $0x80] sm:$0xff]
        %v214 = vld [vmem:[%s194 + $0x88] sm:$0x3]
        %v215 = vld [vmem:[%s194 + $0x90] sm:$0xff]
        %v216 = vld [vmem:[%s194 + $0x98] sm:$0xff]
        %v217 = vld [vmem:[%s194 + $0xa0] sm:$0x3]
        %vm233 = vcmask 1046528
        %v234 = vrot.slane %v197, 1
        %v235 = vrot.slane %v198, 1
        %v236 = vsel %vm233, %v234, %v235
        %v237 = vrot.slane %v199, 1
        %v238 = vsel %vm233, %v235, %v237
        %v239 = vrot.slane %v200, 1
        %v240 = vrot.slane %v201, 1
        %v241 = vsel %vm233, %v239, %v240
        %v242 = vrot.slane %v202, 1
        %v243 = vsel %vm233, %v240, %v242
        %v244 = vrot.slane %v203, 1
        %v245 = vrot.slane %v204, 1
        %v246 = vsel %vm233, %v244, %v245
        %v247 = vrot.slane %v205, 1
        %v248 = vsel %vm233, %v245, %v247
        %v249 = vrot.slane %v206, 1
        %v250 = vrot.slane %v207, 1
        %v251 = vsel %vm233, %v249, %v250
        %v252 = vrot.slane %v208, 1
        %v253 = vsel %vm233, %v250, %v252
        %v254 = vrot.slane %v209, 1
        %v255 = vrot.slane %v210, 1
        %v256 = vsel %vm233, %v254, %v255
        %v257 = vrot.slane %v211, 1
        %v258 = vsel %vm233, %v255, %v257
        %259 = vrot.lane.b32.xlu0 %v236, 4
        %v260 = vpop.permute.xlu0 %259
        %261 = vrot.lane.b32.xlu0 %v238, 4
        %v262 = vpop.permute.xlu0 %261
        %263 = vrot.lane.b32.xlu0 %v241, 4
        %v264 = vpop.permute.xlu0 %263
        %265 = vrot.lane.b32.xlu0 %v243, 4
        %v266 = vpop.permute.xlu0 %265
        %267 = vrot.lane.b32.xlu0 %v246, 4
        %v268 = vpop.permute.xlu0 %267
        %269 = vrot.lane.b32.xlu0 %v248, 4
        %v270 = vpop.permute.xlu0 %269
        %271 = vrot.lane.b32.xlu0 %v251, 4
        %v272 = vpop.permute.xlu0 %271
        %273 = vrot.lane.b32.xlu0 %v253, 4
        %v274 = vpop.permute.xlu0 %273
        %275 = vrot.lane.b32.xlu0 %v256, 4
        %v276 = vpop.permute.xlu0 %275
        %277 = vrot.lane.b32.xlu0 %v258, 4
        %v278 = vpop.permute.xlu0 %277
        %vm289 = vcmask 1045504
        %v290 = vrot.slane %v197, 2
        %v291 = vrot.slane %v198, 2
        %v292 = vsel %vm289, %v290, %v291
        %v293 = vrot.slane %v199, 2
        %v294 = vsel %vm289, %v291, %v293
        %v295 = vrot.slane %v200, 2
        %v296 = vrot.slane %v201, 2
        %v297 = vsel %vm289, %v295, %v296
        %v298 = vrot.slane %v202, 2
        %v299 = vsel %vm289, %v296, %v298
        %v300 = vrot.slane %v203, 2
        %v301 = vrot.slane %v204, 2
        %v302 = vsel %vm289, %v300, %v301
        %v303 = vrot.slane %v205, 2
        %v304 = vsel %vm289, %v301, %v303
        %v305 = vrot.slane %v206, 2
        %v306 = vrot.slane %v207, 2
        %v307 = vsel %vm289, %v305, %v306
        %v308 = vrot.slane %v208, 2
        %v309 = vsel %vm289, %v306, %v308
        %v310 = vrot.slane %v209, 2
        %v311 = vrot.slane %v210, 2
        %v312 = vsel %vm289, %v310, %v311
        %v313 = vrot.slane %v211, 2
        %v314 = vsel %vm289, %v311, %v313
        %315 = vrot.lane.b32.xlu0 %v292, 8
        %v316 = vpop.permute.xlu0 %315
        %317 = vrot.lane.b32.xlu0 %v294, 8
        %v318 = vpop.permute.xlu0 %317
        %319 = vrot.lane.b32.xlu0 %v297, 8
        %v320 = vpop.permute.xlu0 %319
        %321 = vrot.lane.b32.xlu0 %v299, 8
        %v322 = vpop.permute.xlu0 %321
        %323 = vrot.lane.b32.xlu0 %v302, 8
        %v324 = vpop.permute.xlu0 %323
        %325 = vrot.lane.b32.xlu0 %v304, 8
        %v326 = vpop.permute.xlu0 %325
        %327 = vrot.lane.b32.xlu0 %v307, 8
        %v328 = vpop.permute.xlu0 %327
        %329 = vrot.lane.b32.xlu0 %v309, 8
        %v330 = vpop.permute.xlu0 %329
        %331 = vrot.lane.b32.xlu0 %v312, 8
        %v332 = vpop.permute.xlu0 %331
        %333 = vrot.lane.b32.xlu0 %v314, 8
        %v334 = vpop.permute.xlu0 %333
        %347 = vrot.lane.b32.xlu0 %v200, 12
        %v348 = vpop.permute.xlu0 %347
        %349 = vrot.lane.b32.xlu0 %v201, 12
        %v350 = vpop.permute.xlu0 %349
        %351 = vrot.lane.b32.xlu0 %v203, 12
        %v352 = vpop.permute.xlu0 %351
        %353 = vrot.lane.b32.xlu0 %v204, 12
        %v354 = vpop.permute.xlu0 %353
        %355 = vrot.lane.b32.xlu0 %v206, 12
        %v356 = vpop.permute.xlu0 %355
        %357 = vrot.lane.b32.xlu0 %v207, 12
        %v358 = vpop.permute.xlu0 %357
        %359 = vrot.lane.b32.xlu0 %v209, 12
        %v360 = vpop.permute.xlu0 %359
        %361 = vrot.lane.b32.xlu0 %v210, 12
        %v362 = vpop.permute.xlu0 %361
        %363 = vrot.lane.b32.xlu0 %v212, 12
        %v364 = vpop.permute.xlu0 %363
        %365 = vrot.lane.b32.xlu0 %v213, 12
        %v366 = vpop.permute.xlu0 %365
        %v378 = vrot.slane %v212, 1
        %v379 = vrot.slane %v213, 1
        %v380 = vsel %vm233, %v378, %v379
        %v381 = vrot.slane %v214, 1
        %v382 = vsel %vm233, %v379, %v381
        %383 = vrot.lane.b32.xlu0 %v241, 16
        %v384 = vpop.permute.xlu0 %383
        %385 = vrot.lane.b32.xlu0 %v243, 16
        %v386 = vpop.permute.xlu0 %385
        %387 = vrot.lane.b32.xlu0 %v246, 16
        %v388 = vpop.permute.xlu0 %387
        %389 = vrot.lane.b32.xlu0 %v248, 16
        %v390 = vpop.permute.xlu0 %389
        %391 = vrot.lane.b32.xlu0 %v251, 16
        %v392 = vpop.permute.xlu0 %391
        %393 = vrot.lane.b32.xlu0 %v253, 16
        %v394 = vpop.permute.xlu0 %393
        %395 = vrot.lane.b32.xlu0 %v256, 16
        %v396 = vpop.permute.xlu0 %395
        %397 = vrot.lane.b32.xlu0 %v258, 16
        %v398 = vpop.permute.xlu0 %397
        %399 = vrot.lane.b32.xlu0 %v380, 16
        %v400 = vpop.permute.xlu0 %399
        %401 = vrot.lane.b32.xlu0 %v382, 16
        %v402 = vpop.permute.xlu0 %401
        %v413 = vrot.slane %v212, 2
        %v414 = vrot.slane %v213, 2
        %v415 = vsel %vm289, %v413, %v414
        %v416 = vrot.slane %v214, 2
        %v417 = vsel %vm289, %v414, %v416
        %418 = vrot.lane.b32.xlu0 %v297, 20
        %v419 = vpop.permute.xlu0 %418
        %420 = vrot.lane.b32.xlu0 %v299, 20
        %v421 = vpop.permute.xlu0 %420
        %422 = vrot.lane.b32.xlu0 %v302, 20
        %v423 = vpop.permute.xlu0 %422
        %424 = vrot.lane.b32.xlu0 %v304, 20
        %v425 = vpop.permute.xlu0 %424
        %426 = vrot.lane.b32.xlu0 %v307, 20
        %v427 = vpop.permute.xlu0 %426
        %428 = vrot.lane.b32.xlu0 %v309, 20
        %v429 = vpop.permute.xlu0 %428
        %430 = vrot.lane.b32.xlu0 %v312, 20
        %v431 = vpop.permute.xlu0 %430
        %432 = vrot.lane.b32.xlu0 %v314, 20
        %v433 = vpop.permute.xlu0 %432
        %434 = vrot.lane.b32.xlu0 %v415, 20
        %v435 = vpop.permute.xlu0 %434
        %436 = vrot.lane.b32.xlu0 %v417, 20
        %v437 = vpop.permute.xlu0 %436
        %450 = vrot.lane.b32.xlu0 %v203, 24
        %v451 = vpop.permute.xlu0 %450
        %452 = vrot.lane.b32.xlu0 %v204, 24
        %v453 = vpop.permute.xlu0 %452
        %454 = vrot.lane.b32.xlu0 %v206, 24
        %v455 = vpop.permute.xlu0 %454
        %456 = vrot.lane.b32.xlu0 %v207, 24
        %v457 = vpop.permute.xlu0 %456
        %458 = vrot.lane.b32.xlu0 %v209, 24
        %v459 = vpop.permute.xlu0 %458
        %460 = vrot.lane.b32.xlu0 %v210, 24
        %v461 = vpop.permute.xlu0 %460
        %462 = vrot.lane.b32.xlu0 %v212, 24
        %v463 = vpop.permute.xlu0 %462
        %464 = vrot.lane.b32.xlu0 %v213, 24
        %v465 = vpop.permute.xlu0 %464
        %466 = vrot.lane.b32.xlu0 %v215, 24
        %v467 = vpop.permute.xlu0 %466
        %468 = vrot.lane.b32.xlu0 %v216, 24
        %v469 = vpop.permute.xlu0 %468
        %v481 = vrot.slane %v215, 1
        %v482 = vrot.slane %v216, 1
        %v483 = vsel %vm233, %v481, %v482
        %v484 = vrot.slane %v217, 1
        %v485 = vsel %vm233, %v482, %v484
        %486 = vrot.lane.b32.xlu0 %v246, 28
        %v487 = vpop.permute.xlu0 %486
        %488 = vrot.lane.b32.xlu0 %v248, 28
        %v489 = vpop.permute.xlu0 %488
        %490 = vrot.lane.b32.xlu0 %v251, 28
        %v491 = vpop.permute.xlu0 %490
        %492 = vrot.lane.b32.xlu0 %v253, 28
        %v493 = vpop.permute.xlu0 %492
        %494 = vrot.lane.b32.xlu0 %v256, 28
        %v495 = vpop.permute.xlu0 %494
        %496 = vrot.lane.b32.xlu0 %v258, 28
        %v497 = vpop.permute.xlu0 %496
        %498 = vrot.lane.b32.xlu0 %v380, 28
        %v499 = vpop.permute.xlu0 %498
        %500 = vrot.lane.b32.xlu0 %v382, 28
        %v501 = vpop.permute.xlu0 %500
        %502 = vrot.lane.b32.xlu0 %v483, 28
        %v503 = vpop.permute.xlu0 %502
        %504 = vrot.lane.b32.xlu0 %v485, 28
        %v505 = vpop.permute.xlu0 %504
        %v516 = vrot.slane %v215, 2
        %v517 = vrot.slane %v216, 2
        %v518 = vsel %vm289, %v516, %v517
        %v519 = vrot.slane %v217, 2
        %v520 = vsel %vm289, %v517, %v519
        %521 = vrot.lane.b32.xlu0 %v302, 32
        %v522 = vpop.permute.xlu0 %521
        %523 = vrot.lane.b32.xlu0 %v304, 32
        %v524 = vpop.permute.xlu0 %523
        %525 = vrot.lane.b32.xlu0 %v307, 32
        %v526 = vpop.permute.xlu0 %525
        %527 = vrot.lane.b32.xlu0 %v309, 32
        %v528 = vpop.permute.xlu0 %527
        %529 = vrot.lane.b32.xlu0 %v312, 32
        %v530 = vpop.permute.xlu0 %529
        %531 = vrot.lane.b32.xlu0 %v314, 32
        %v532 = vpop.permute.xlu0 %531
        %533 = vrot.lane.b32.xlu0 %v415, 32
        %v534 = vpop.permute.xlu0 %533
        %535 = vrot.lane.b32.xlu0 %v417, 32
        %v536 = vpop.permute.xlu0 %535
        %537 = vrot.lane.b32.xlu0 %v518, 32
        %v538 = vpop.permute.xlu0 %537
        %539 = vrot.lane.b32.xlu0 %v520, 32
        %v540 = vpop.permute.xlu0 %539
        %vm551 = vcmask 31744
        %v552 = vsel %vm551, %v197, %v260
        %v553 = vsel %vm551, %v198, %v262
        %v554 = vsel %vm551, %v200, %v264
        %v555 = vsel %vm551, %v201, %v266
        %v556 = vsel %vm551, %v203, %v268
        %v557 = vsel %vm551, %v204, %v270
        %v558 = vsel %vm551, %v206, %v272
        %v559 = vsel %vm551, %v207, %v274
        %v560 = vsel %vm551, %v209, %v276
        %v561 = vsel %vm551, %v210, %v278
        %vm562 = vcmask 64512
        %v563 = vsel %vm562, %v552, %v316
        %v564 = vsel %vm562, %v553, %v318
        %v565 = vsel %vm562, %v554, %v320
        %v566 = vsel %vm562, %v555, %v322
        %v567 = vsel %vm562, %v556, %v324
        %v568 = vsel %vm562, %v557, %v326
        %v569 = vsel %vm562, %v558, %v328
        %v570 = vsel %vm562, %v559, %v330
        %v571 = vsel %vm562, %v560, %v332
        %v572 = vsel %vm562, %v561, %v334
        %vm573 = vcmask 97280
        %v574 = vsel %vm573, %v563, %v348
        %v575 = vsel %vm573, %v564, %v350
        %v576 = vsel %vm573, %v565, %v352
        %v577 = vsel %vm573, %v566, %v354
        %v578 = vsel %vm573, %v567, %v356
        %v579 = vsel %vm573, %v568, %v358
        %v580 = vsel %vm573, %v569, %v360
        %v581 = vsel %vm573, %v570, %v362
        %v582 = vsel %vm573, %v571, %v364
        %v583 = vsel %vm573, %v572, %v366
        %vm584 = vcmask 130048
        %v585 = vsel %vm584, %v574, %v384
        %v586 = vsel %vm584, %v575, %v386
        %v587 = vsel %vm584, %v576, %v388
        %v588 = vsel %vm584, %v577, %v390
        %v589 = vsel %vm584, %v578, %v392
        %v590 = vsel %vm584, %v579, %v394
        %v591 = vsel %vm584, %v580, %v396
        %v592 = vsel %vm584, %v581, %v398
        %v593 = vsel %vm584, %v582, %v400
        %v594 = vsel %vm584, %v583, %v402
        %vm595 = vcmask 162816
        %v596 = vsel %vm595, %v585, %v419
        %v597 = vsel %vm595, %v586, %v421
        %v598 = vsel %vm595, %v587, %v423
        %v599 = vsel %vm595, %v588, %v425
        %v600 = vsel %vm595, %v589, %v427
        %v601 = vsel %vm595, %v590, %v429
        %v602 = vsel %vm595, %v591, %v431
        %v603 = vsel %vm595, %v592, %v433
        %v604 = vsel %vm595, %v593, %v435
        %v605 = vsel %vm595, %v594, %v437
        %vm606 = vcmask 195584
        %v607 = vsel %vm606, %v596, %v451
        %v608 = vsel %vm606, %v597, %v453
        %v609 = vsel %vm606, %v598, %v455
        %v610 = vsel %vm606, %v599, %v457
        %v611 = vsel %vm606, %v600, %v459
        %v612 = vsel %vm606, %v601, %v461
        %v613 = vsel %vm606, %v602, %v463
        %v614 = vsel %vm606, %v603, %v465
        %v615 = vsel %vm606, %v604, %v467
        %v616 = vsel %vm606, %v605, %v469
        %vm617 = vcmask 228352
        %v618 = vsel %vm617, %v607, %v487
        %v619 = vsel %vm617, %v608, %v489
        %v620 = vsel %vm617, %v609, %v491
        %v621 = vsel %vm617, %v610, %v493
        %v622 = vsel %vm617, %v611, %v495
        %v623 = vsel %vm617, %v612, %v497
        %v624 = vsel %vm617, %v613, %v499
        %v625 = vsel %vm617, %v614, %v501
        %v626 = vsel %vm617, %v615, %v503
        %v627 = vsel %vm617, %v616, %v505
        %vm628 = vcmask 261120
        %v629 = vsel %vm628, %v618, %v522
        %v630 = vsel %vm628, %v619, %v524
        %v631 = vsel %vm628, %v620, %v526
        %v632 = vsel %vm628, %v621, %v528
        %v633 = vsel %vm628, %v622, %v530
        %v634 = vsel %vm628, %v623, %v532
        %v635 = vsel %vm628, %v624, %v534
        %v636 = vsel %vm628, %v625, %v536
        %v637 = vsel %vm628, %v626, %v538
        %v638 = vsel %vm628, %v627, %v540
        %v639 = vld [vmem:[%s1] sm:$0xff]
        %v640 = vld [vmem:[%s1 + $0x8] sm:$0xff]
        %v641 = vld [vmem:[%s1 + $0x10] sm:$0xff]
        %v642 = vld [vmem:[%s1 + $0x18] sm:$0xff]
        %v643 = vld [vmem:[%s1 + $0x20] sm:$0xf]
        %v644 = vld [vmem:[%s2] sm:$0x1]
        %v646 = vlaneseq
        %v647 = vshrl.u32 %v646, 7
        %v648 = vsub.s32 0, %v647
        %v649 = vrot.slane %v644, %v648
        %vm651 = vcmask 293888
        %v653 = vsel %vm651, %v629, 0
        %v656 = vsel %vm651, %v630, 0
        %v659 = vsel %vm651, %v631, 0
        %v662 = vsel %vm651, %v632, 0
        %v665 = vsel %vm651, %v633, 0
        %v668 = vsel %vm651, %v634, 0
        %v671 = vsel %vm651, %v635, 0
        %v674 = vsel %vm651, %v636, 0
        %v677 = vsel %vm651, %v637, 0
        %v680 = vsel %vm651, %v638, 0
        %vm682 = vcmask 1043456
        %v684 = vsel %vm682, %v643, 0
        %686 = vmatprep.subr.mxu0 0.0
        %687 = vmatpush1.msra.mxu0 0.0
        %688 = vmatprep.subr.mxu0 0.0
        %689 = vmatpush1.msra.mxu0 0.0
        %690 = vmatprep.subr.mxu0 0.0
        %691 = vmatpush1.msra.mxu0 0.0
        %692 = vmatprep.subr.mxu0 0.0
        %693 = vmatpush1.msra.mxu0 0.0
        %694 = vmatprep.subr.mxu0 0.0
        %695 = vmatpush1.msra.mxu0 0.0
        %696 = vmatprep.subr.mxu0 0.0
        %697 = vmatpush1.msra.mxu0 0.0
        %698 = vmatprep.subr.mxu0 0.0
        %699 = vmatpush1.msra.mxu0 0.0
        %700 = vmatprep.subr.mxu0 0.0
        %701 = vmatpush1.msra.mxu0 0.0
        %702 = vmatprep.subr.mxu0 0.0
        %703 = vmatpush1.msra.mxu0 0.0
        %704 = vmatprep.subr.mxu0 0.0
        %705 = vmatpush1.msra.mxu0 0.0
        %706 = vmatprep.subr.mxu0 0.0
        %707 = vmatpush1.msra.mxu0 0.0
        %708 = vmatprep.subr.mxu0 0.0
        %709 = vmatpush1.msra.mxu0 %v684
        %710 = vmatprep.subr.mxu0 0.0
        %711 = vmatpush1.msra.mxu0 %v642
        %712 = vmatprep.subr.mxu0 0.0
        %713 = vmatpush1.msra.mxu0 %v641
        %714 = vmatprep.subr.mxu0 0.0
        %715 = vmatpush1.msra.mxu0 %v640
        %716 = vmatprep.subr.mxu0 0.0
        %717 = vmatpush1.msra.mxu0 %v639
        %718 = vmatprep.subr.mxu0 0.0
        %719 = vmatpush2.msra.mxu0 0.0
        %720 = vmatprep.subr.mxu0 0.0
        %721 = vmatpush2.msra.mxu0 0.0
        %722 = vmatprep.subr.mxu0 0.0
        %723 = vmatpush2.msra.mxu0 0.0
        %724 = vmatprep.subr.mxu0 0.0
        %725 = vmatpush2.msra.mxu0 0.0
        %726 = vmatprep.subr.mxu0 0.0
        %727 = vmatpush2.msra.mxu0 0.0
        %728 = vmatprep.subr.mxu0 0.0
        %729 = vmatpush2.msra.mxu0 0.0
        %730 = vmatprep.subr.mxu0 0.0
        %731 = vmatpush2.msra.mxu0 0.0
        %732 = vmatprep.subr.mxu0 0.0
        %733 = vmatpush2.msra.mxu0 0.0
        %734 = vmatprep.subr.mxu0 0.0
        %735 = vmatpush2.msra.mxu0 0.0
        %736 = vmatprep.subr.mxu0 0.0
        %737 = vmatpush2.msra.mxu0 0.0
        %738 = vmatprep.subr.mxu0 0.0
        %739 = vmatpush2.msra.mxu0 0.0
        %740 = vmatprep.subr.mxu0 0.0
        %741 = vmatpush2.msra.mxu0 0.0
        %742 = vmatprep.subr.mxu0 0.0
        %743 = vmatpush2.msra.mxu0 0.0
        %744 = vmatprep.subr.mxu0 0.0
        %745 = vmatpush2.msra.mxu0 0.0
        %746 = vmatprep.subr.mxu0 0.0
        %747 = vmatpush2.msra.mxu0 0.0
        %748 = vmatprep.subr.mxu0 0.0
        %749 = vmatpush2.msra.mxu0 0.0
        %750 = vmatprep.mubr.f32.mxu0 0.0
        %751 = vmatmul.mubr.f32.gmra.mxu0 %v653
        %v752 = vpop.f32.mrf.mxu0
        %v753 = vadd.f32 %v649, %v752
        %v754 = vpop.f32.mrf.mxu0
        %755 = vmatprep.mubr.f32.mxu0 0.0
        %756 = vmatmul.mubr.f32.gmra.mxu0 %v656
        %v757 = vpop.f32.mrf.mxu0
        %v758 = vadd.f32 %v649, %v757
        %v759 = vpop.f32.mrf.mxu0
        %760 = vmatprep.mubr.f32.mxu0 0.0
        %761 = vmatmul.mubr.f32.gmra.mxu0 %v659
        %v762 = vpop.f32.mrf.mxu0
        %v763 = vadd.f32 %v649, %v762
        %v764 = vpop.f32.mrf.mxu0
        %765 = vmatprep.mubr.f32.mxu0 0.0
        %766 = vmatmul.mubr.f32.gmra.mxu0 %v662
        %v767 = vpop.f32.mrf.mxu0
        %v768 = vadd.f32 %v649, %v767
        %v769 = vpop.f32.mrf.mxu0
        %770 = vmatprep.mubr.f32.mxu0 0.0
        %771 = vmatmul.mubr.f32.gmra.mxu0 %v665
        %v772 = vpop.f32.mrf.mxu0
        %v773 = vadd.f32 %v649, %v772
        %v774 = vpop.f32.mrf.mxu0
        %775 = vmatprep.mubr.f32.mxu0 0.0
        %776 = vmatmul.mubr.f32.gmra.mxu0 %v668
        %v777 = vpop.f32.mrf.mxu0
        %v778 = vadd.f32 %v649, %v777
        %v779 = vpop.f32.mrf.mxu0
        %780 = vmatprep.mubr.f32.mxu0 0.0
        %781 = vmatmul.mubr.f32.gmra.mxu0 %v671
        %v782 = vpop.f32.mrf.mxu0
        %v783 = vadd.f32 %v649, %v782
        %v784 = vpop.f32.mrf.mxu0
        %785 = vmatprep.mubr.f32.mxu0 0.0
        %786 = vmatmul.mubr.f32.gmra.mxu0 %v674
        %v787 = vpop.f32.mrf.mxu0
        %v788 = vadd.f32 %v649, %v787
        %v789 = vpop.f32.mrf.mxu0
        %790 = vmatprep.mubr.f32.mxu0 0.0
        %791 = vmatmul.mubr.f32.gmra.mxu0 %v677
        %v792 = vpop.f32.mrf.mxu0
        %v793 = vadd.f32 %v649, %v792
        %v794 = vpop.f32.mrf.mxu0
        %795 = vmatprep.mubr.f32.mxu0 0.0
        %796 = vmatmul.mubr.f32.gmra.mxu0 %v680
        %v797 = vpop.f32.mrf.mxu0
        %v798 = vadd.f32 %v649, %v797
        %v799 = vpop.f32.mrf.mxu0
        %800 = vdwg.mxu0
        %801 = vst [vmem:[%s187] sm:$0xff] %v753
        %802 = vst [vmem:[%s187 + $0x8] sm:$0xff] %v758
        %803 = vst [vmem:[%s187 + $0x10] sm:$0xff] %v763
        %804 = vst [vmem:[%s187 + $0x18] sm:$0xff] %v768
        %805 = vst [vmem:[%s187 + $0x20] sm:$0xff] %v773
        %806 = vst [vmem:[%s187 + $0x28] sm:$0xff] %v778
        %807 = vst [vmem:[%s187 + $0x30] sm:$0xff] %v783
        %808 = vst [vmem:[%s187 + $0x38] sm:$0xff] %v788
        %809 = vst [vmem:[%s187 + $0x40] sm:$0xff] %v793
        %810 = vst [vmem:[%s187 + $0x48] sm:$0xff] %v798
        %s811 = sand.u32 %s111, 1
        %s812 = scalar_lea.sflag [#allocation3], %s811
        %s813 = sand.u32 %s111, 1
        %s814 = smul.addr %s813, 80
        %s815 = scalar_lea.vmem [#allocation2], %s814
        // Predicated region
        $region33: #{tpu_custom_call.1} parent=31 // pred_check
          %p816 = pneg %p121
        $region34: #{tpu_custom_call.1} parent=31 // pred_check_branch
          %818 = sbr.rel (%p816) target = $region36
        $region35: #{tpu_custom_call.1} parent=31 // pred_region
          %s820 = ssub.s32 1280, 1280
          %821 = vsyncadd %s812, %s820
          %s822 = smul.addr %s22, 10
          %s823 = smul.addr %s21, 30
          %s824 = sadd.s32 %s822, %s823
          %s825 = smul.addr %s824, 128
          %s826 = scalar_lea.hbm %s3, %s825
          %s827 = sshll.u32 %s815, 4
          %s828 = int_to_ptr.vmem [resolvable:$true] %s827
          %833 = dma.vmem_to_hbm [thread:$0]  %s828, 1280, %s826, %s812, 128, 128, 8
        $region36: #{tpu_custom_call.1} parent=31 // pred_fallthru
          _
      $region32: #{tpu_custom_call.1} parent=5 // pred_fallthru
        _
      %p834 = scmp.le.s32.totalorder 2, %s12
      // Predicated region
      $region37: #{tpu_custom_call.1} parent=5 // pred_check
        %p835 = pneg %p834
      $region38: #{tpu_custom_call.1} parent=5 // pred_check_branch
        %837 = sbr.rel (%p835) target = $region40
      $region39: #{tpu_custom_call.1} parent=5 // pred_region
        %s838 = ssub.s32 %s12, 2
        // Predicated region
        $region41: #{tpu_custom_call.1} parent=39 // pred_check
          %p839 = pneg %p127
        $region42: #{tpu_custom_call.1} parent=39 // pred_check_branch
          %841 = sbr.rel (%p839) target = $region44
        $region43: #{tpu_custom_call.1} parent=39 // pred_region
          %s842 = sand.u32 %s112, 1
          %s843 = scalar_lea.sflag [#allocation3], %s842
          %s844 = sand.u32 %s112, 1
          %s845 = smul.addr %s844, 80
          %s846 = scalar_lea.vmem [#allocation2], %s845
          %847 = dma.done %s843, 1280
        $region44: #{tpu_custom_call.1} parent=39 // pred_fallthru
          _
      $region40: #{tpu_custom_call.1} parent=5 // pred_fallthru
        _
    $region6: #{tpu_custom_call.1} parent=1 // loop_footer
      %s16 = sadd.s32 1, %s12
    $region7: #{tpu_custom_call.1} parent=1 // loop_footer_branch
      %11 = sbr.rel target = $region3
    $region8: #{tpu_custom_call.1} parent=1 // loop_exit
      _
    %848 = vsyncpa [#allocation3], 1
    %s849 = scalar_lea.sflag [#allocation3], 1
    %850 = vsyncpa %s849, 1

</llo_original>
